<compile_context>
chip_gen: v7x
topology: tpu7x:2x2x1
jax: 0.10.0
libtpu: 0.0.40
codegen_flags: <defaults>
</compile_context>

<pallas_src>
import jax
import jax.numpy as jnp
from jax.experimental import pallas as pl
from jax.experimental.pallas import tpu as pltpu


_LANE = 128
_BLOCK_BYTES = 2 << 20  # ~2 MiB per block: ~85% HBM roofline, safe on v5e's
                        # 16 MiB scoped VMEM (2 bufs in + 2 bufs out = 8 MiB).


# ---------------------------------------------------------------------------
# Pallas kernel: tiled identity copy.
# ---------------------------------------------------------------------------
def _copy_kernel(x_ref, o_ref):
    o_ref[...] = x_ref[...]


def _sublane_multiple(dtype) -> int:
    """Row granularity so VMEM tiles are native: (8,128) f32, (16,128) bf16,
    (32,128) int8/fp8 — sub-32-bit dtypes pack along sublanes."""
    itemsize = jnp.dtype(dtype).itemsize
    if itemsize >= 4:
        return 8
    if itemsize == 2:
        return 16
    return 32


def _pick_tile_rows(rows: int, lanes: int, itemsize: int, row_align: int) -> int:
    """Byte-budget tile selection (dtype/shape independent).

    Largest row count such that one (tile, lanes) block is <= _BLOCK_BYTES and
    tile is a multiple of the dtype's sublane granularity.  If the whole array
    fits in one block, split into (at least) two grid steps so v7x's two
    TensorCores can both stream (harmless on single-TC v5e/v6e).
    """
    budget_rows = _BLOCK_BYTES // (lanes * itemsize)
    budget_rows = max(row_align, (budget_rows // row_align) * row_align)
    tile = min(rows, budget_rows)
    tile = max(row_align, (tile // row_align) * row_align)
    if pl.cdiv(rows, tile) < 2 and rows >= 2 * row_align:
        half = pl.cdiv(rows, 2)
        tile = max(row_align, ((half + row_align - 1) // row_align) * row_align)
    return tile


def pallas_passthrough(x: jax.Array, *, force_kernel: bool = False) -> jax.Array:
    """Identity over x.

    Default: returns x with no HBM round-trip at all (a pure passthrough has
    zero compute, so any copy is wasted bandwidth).  With force_kernel=True,
    runs a tiled, lane-dense, pipelined Pallas copy kernel (used here to
    exercise the TPU path; a real decoder subclass would fold its compute —
    attention / matmuls over out_enc — into this kernel instead).
    """
    if not force_kernel or x.size == 0:
        return x

    total = x.size
    row_align = _sublane_multiple(x.dtype)
    chunk = row_align * _LANE
    pad = (-total) % chunk

    flat = x.reshape(-1)
    if pad:
        # Pad the flat view to a (row_align, 128) multiple so every store is a
        # full-lane, full-sublane vst (no masked vst.msk) on v5e/v6e/v7x.
        # TODO(synk): the pad/slice pair costs an extra pass for awkward
        # sizes; a real decoder kernel would mask in-kernel instead.
        flat = jnp.pad(flat, (0, pad))
    x2 = flat.reshape(-1, _LANE)

    rows, lanes = x2.shape
    itemsize = jnp.dtype(x2.dtype).itemsize
    tile = _pick_tile_rows(rows, lanes, itemsize, row_align)
    grid = (pl.cdiv(rows, tile),)
    nbytes = rows * lanes * itemsize

    out = pl.pallas_call(
        _copy_kernel,
        out_shape=jax.ShapeDtypeStruct(x2.shape, x2.dtype),
        grid=grid,
        in_specs=[pl.BlockSpec((tile, lanes), lambda i: (i, 0))],
        out_specs=pl.BlockSpec((tile, lanes), lambda i: (i, 0)),
        # Identity copy: alias output onto input so no second HBM buffer is
        # allocated (XLA inserts a protective copy only if the input must
        # stay live, so this is always safe).
        input_output_aliases={0: 0},
        cost_estimate=pl.CostEstimate(
            flops=0, transcendentals=0, bytes_accessed=2 * nbytes),
        compiler_params=pltpu.CompilerParams(
            dimension_semantics=("parallel",)),  # v7x: shard rows over 2 TCs
    )(x2)

    flat_out = out.reshape(-1)
    if pad:
        flat_out = flat_out[:total]
    return flat_out.reshape(x.shape)


# ---------------------------------------------------------------------------
# Faithful port of BaseDecoder (JAX side, no torch).
# ---------------------------------------------------------------------------
class BaseDecoder:
    """Base decoder class for text recognition (JAX/Pallas port)."""

    def __init__(self, **kwargs):
        # The PyTorch __init__ defines no parameters.
        pass

    def init_weights(self):
        pass

    # Abstract in the reference module; concrete subclasses must override.
    def forward_train(self, feat, out_enc, targets_dict, img_metas):
        raise NotImplementedError

    def forward_test(self, feat, out_enc, img_metas):
        raise NotImplementedError

    def forward(self, feat, out_enc, targets_dict=None, img_metas=None,
                train_mode=True):
        self.train_mode = train_mode
        if train_mode:
            return self.forward_train(feat, out_enc, targets_dict, img_metas)
        return self.forward_test(feat, out_enc, img_metas)

    __call__ = forward


class PassThroughDecoder(BaseDecoder):
    """Minimal concrete decoder: returns out_enc (optionally via the Pallas
    copy kernel).  Adds no parameters, matching the parameter-free base
    __init__; exists only so BaseDecoder.forward()'s dispatch is exercised."""

    def __init__(self, use_kernel: bool = False, **kwargs):
        super().__init__(**kwargs)
        self._use_kernel = use_kernel

    def forward_train(self, feat, out_enc, targets_dict, img_metas):
        return pallas_passthrough(out_enc, force_kernel=self._use_kernel)

    def forward_test(self, feat, out_enc, img_metas):
        return pallas_passthrough(out_enc, force_kernel=self._use_kernel)


# ---------------------------------------------------------------------------
# Driver
# ---------------------------------------------------------------------------
if __name__ == "__main__":
    key = jax.random.PRNGKey(0)
    k_feat, k_enc, k_big, k_rag, k_bf = jax.random.split(key, 5)

    B, C, H, W = 2, 4, 16, 16      # NCHW backbone feature map
    T, D = 8, 32                   # encoder output: [B, T, D]

    feat = jax.random.normal(k_feat, (B, C, H, W), dtype=jnp.float32)
    out_enc = jax.random.normal(k_enc, (B, T, D), dtype=jnp.float32)

    # Sanity-check the faithful base-class behaviour (abstract methods raise).
    base = BaseDecoder()
    for mode in (True, False):
        try:
            base(feat, out_enc, targets_dict=None, img_metas=None,
                 train_mode=mode)
            raise AssertionError("BaseDecoder abstract method did not raise")
        except NotImplementedError:
            pass

    # Exercise the dispatch + Pallas kernel via the minimal concrete decoder.
    dec = PassThroughDecoder(use_kernel=True)
    dec.init_weights()

    y_train = dec(feat, out_enc, targets_dict={}, img_metas=[], train_mode=True)
    y_test = dec(feat, out_enc, train_mode=False)
    jax.block_until_ready(y_train)
    jax.block_until_ready(y_test)

    assert y_train.shape == out_enc.shape and y_train.dtype == out_enc.dtype
    assert bool(jnp.array_equal(y_train, out_enc))
    assert bool(jnp.array_equal(y_test, out_enc))
    assert dec.train_mode is False  # last call set train_mode, as in PyTorch

    # Default decoder: pure identity, no kernel launch, no HBM round-trip.
    dec_fast = PassThroughDecoder()
    y_fast = dec_fast(feat, out_enc, train_mode=False)
    assert y_fast is out_enc

    # Multi-step grid path (grid split so both v7x TCs get work).
    big = jax.random.normal(k_big, (4, 128, 512), dtype=jnp.float32)  # 1 MiB
    y_big = pallas_passthrough(big, force_kernel=True)
    jax.block_until_ready(y_big)
    assert bool(jnp.array_equal(y_big, big))

    # Ragged row count: cdiv grid with a partial final block (rows=40, tile=24).
    rag = jax.random.normal(k_rag, (5, 1024), dtype=jnp.float32)
    y_rag = pallas_passthrough(rag, force_kernel=True)
    jax.block_until_ready(y_rag)
    assert bool(jnp.array_equal(y_rag, rag))

    # bf16 + non-128-multiple size: exercises padding and 16-row sublane align.
    bf = jax.random.normal(k_bf, (3, 100, 40), dtype=jnp.bfloat16)
    y_bf = pallas_passthrough(bf, force_kernel=True)
    jax.block_until_ready(y_bf)
    assert y_bf.shape == bf.shape and y_bf.dtype == bf.dtype
    assert bool(jnp.array_equal(y_bf, bf))

    print("KERNEL_OK")
</pallas_src>

<mosaic_0001>
module attributes {stable_mosaic.version = 11 : i64} {
  func.func @_copy_kernel(%arg0: i32, %arg1: memref<8x128xf32, #tpu.memory_space<vmem>>, %arg2: memref<8x128xf32, #tpu.memory_space<vmem>>) attributes {dimension_semantics = [#tpu.dimension_semantics<parallel>], iteration_bounds = array<i64: 1>, scalar_prefetch = 0 : i64, scratch_operands = 0 : i64, tpu.core_type = #tpu.core_type<tc>, window_params = [{transform_indices = @transform_0, window_bounds = array<i64: 8, 128>}, {transform_indices = @transform_1, window_bounds = array<i64: 8, 128>}]} {
    %c0 = arith.constant 0 : index
    %c0_0 = arith.constant 0 : index
    %0 = vector.load %arg1[%c0, %c0_0] : memref<8x128xf32, #tpu.memory_space<vmem>>, vector<8x128xf32>
    %c0_1 = arith.constant 0 : index
    %c0_2 = arith.constant 0 : index
    %1 = vector.load %arg2[%c0_1, %c0_2] : memref<8x128xf32, #tpu.memory_space<vmem>>, vector<8x128xf32>
    tpu.vector_store %arg2[%c0_1, %c0_2], %0 {strides = array<i32>} : memref<8x128xf32, #tpu.memory_space<vmem>>, vector<8x128xf32>,
    return
  }
  func.func @transform_0(%arg0: i32) -> (i32, i32) {
    %c0_i32 = arith.constant 0 : i32
    %c0_i32_0 = arith.constant 0 : i32
    return %arg0, %c0_i32 : i32, i32
  }
  func.func @transform_1(%arg0: i32) -> (i32, i32) {
    %c0_i32 = arith.constant 0 : i32
    %c0_i32_0 = arith.constant 0 : i32
    return %arg0, %c0_i32 : i32, i32
  }
}

</mosaic_0001>

<llo_original>
// kernel: tpu_custom_call.1
$region0: #{tpu_custom_call.1}
  #allocation0 [shape = 'u32[]', space=smem, size = 0x4, offset = 0x4, fixed_abs, tag = 'smem constant byte address 0x4 - core index']
  #allocation1 [shape = 'u32[144,128]{1,0:T(1,128)}', space=vmem, size = 0x12000, scoped, tag = 'internal scratch']
  %s0 = inlined_call_operand.hbm [shape: f32[8,128], index: 0, kind: input, shape index: {}, may-alias: {0,1}]
  %s1 = inlined_call_operand.hbm [shape: f32[8,128], index: 1, kind: output, shape index: {}, may-alias: {0,1}]
  %s2 = sld [smem:[#allocation0]]
  $region18: #{tpu_custom_call.1} parent=0
    _
  %s4 = ssub.s32 1, %s2
  %s5 = scalar_select 0, %s4, %s2
  $region1: #{tpu_custom_call.1} parent=0
    #allocation2 [shape = 'u8[4096]{0}', space=vmem, size = 0x1000, scoped, tag = 'input window, operand 0, single buffered']
    #allocation3 [shape = 's32[1]{0}', space=sflag, size = 0x4, scoped, tag = 'scoped memory for tpu_custom_call.1']
    #allocation4 [shape = 's32[1]{0}', space=sflag, size = 0x4, scoped, tag = 'scoped memory for tpu_custom_call.1']
    #allocation5 [shape = 'u8[4096]{0}', space=vmem, size = 0x1000, scoped, tag = 'output window, operand 0, single buffered']
    %6 = vsyncpa [#allocation3], 0
    %7 = vsyncpa [#allocation4], 0
    // Predicated region
    $region2: #{tpu_custom_call.1} parent=1 // pred_check
      _
    $region3: #{tpu_custom_call.1} parent=1 // pred_check_branch
      %9 = sbr.rel (0) target = $region5
    $region4: #{tpu_custom_call.1} parent=1 // pred_region
      %s11 = ssub.s32 128, 128
      %12 = vsyncadd [#allocation3], %s11
      %s14 = sshll.u32 [#allocation2], 4
      %s15 = int_to_ptr.vmem [resolvable:$true] %s14
      %17 = dma.hbm_to_vmem [thread:$0]  %s0, 128, %s15, [#allocation3]
    $region5: #{tpu_custom_call.1} parent=1 // pred_fallthru
      _
    // Predicated region
    $region6: #{tpu_custom_call.1} parent=1 // pred_check
      _
    $region7: #{tpu_custom_call.1} parent=1 // pred_check_branch
      %19 = sbr.rel (0) target = $region9
    $region8: #{tpu_custom_call.1} parent=1 // pred_region
      %20 = dma.done [#allocation3], 128
    $region9: #{tpu_custom_call.1} parent=1 // pred_fallthru
      _
    %v21 = vld [vmem:[#allocation2] sm:$0xff]
    %22 = vst [vmem:[#allocation5] sm:$0xff] %v21
    // Predicated region
    $region10: #{tpu_custom_call.1} parent=1 // pred_check
      _
    $region11: #{tpu_custom_call.1} parent=1 // pred_check_branch
      %24 = sbr.rel (0) target = $region13
    $region12: #{tpu_custom_call.1} parent=1 // pred_region
      %s26 = ssub.s32 128, 128
      %27 = vsyncadd [#allocation4], %s26
      %s29 = sshll.u32 [#allocation5], 4
      %s30 = int_to_ptr.vmem [resolvable:$true] %s29
      %32 = dma.vmem_to_hbm [thread:$0]  %s30, 128, %s1, [#allocation4]
    $region13: #{tpu_custom_call.1} parent=1 // pred_fallthru
      _
    // Predicated region
    $region14: #{tpu_custom_call.1} parent=1 // pred_check
      _
    $region15: #{tpu_custom_call.1} parent=1 // pred_check_branch
      %34 = sbr.rel (0) target = $region17
    $region16: #{tpu_custom_call.1} parent=1 // pred_region
      %35 = dma.done [#allocation4], 128
    $region17: #{tpu_custom_call.1} parent=1 // pred_fallthru
      _
    %36 = vsyncpa [#allocation3], 1
    %37 = vsyncpa [#allocation4], 1

</llo_original>
